<compile_context>
chip_gen: v5e
topology: v5e:2x2
jax: 0.10.0
libtpu: 0.0.40
codegen_flags: <defaults>
</compile_context>

<pallas_src>
import functools
import math

import jax
import jax.numpy as jnp
import numpy as np
from jax.experimental import pallas as pl
from jax.experimental.pallas import tpu as pltpu


def mma_kernel(text_ref, ctx_ref, w1t_ref, w2t_ref, bias_ref, vrow_ref, out_ref, *, seq):
    # text_ref: (R, D), ctx_ref: (R, C), out_ref: (R, D) with R = B_t * seq
    r, d = text_ref.shape
    bt = r // seq

    t = text_ref[...]                                   # (R, D)
    c = ctx_ref[...]                                    # (R, C)

    # Fused linear projections (weights pre-transposed to (in, out)), f32 accumulate,
    # single folded bias (b1 + b2).
    proj = (
        jnp.dot(t, w1t_ref[...], preferred_element_type=jnp.float32)
        + jnp.dot(c, w2t_ref[...], preferred_element_type=jnp.float32)
        + bias_ref[...]
    )
    combined = jnp.tanh(proj)                           # (R, D) f32

    # Scores via VPU multiply + lane reduce (replaces an N=1 MXU matmul).
    # bV is omitted: adding a constant to every score does not change the softmax.
    scores = jnp.sum(combined * vrow_ref[...], axis=-1, keepdims=True)   # (R, 1)
    scores3 = scores.reshape(bt, seq, 1)                # tiny per-batch view

    # Softmax over the sequence axis (per batch element).
    m = jnp.max(scores3, axis=1, keepdims=True)         # (B_t, 1, 1)
    e = jnp.exp(scores3 - m)                            # (B_t, S, 1)
    denom = jnp.sum(e, axis=1, keepdims=True)           # (B_t, 1, 1)
    attn = e * pl.reciprocal(denom, approx=False)       # exact keeps 1e-5 tolerance

    out_ref[...] = (attn.reshape(r, 1) * t).astype(out_ref.dtype)


def _pick_batch_tile(batch, seq, d_text, d_ctx, itemsize, block_budget_bytes):
    """Batch tile from a VMEM byte budget, capped so the grid keeps >= min(B,4) steps
    (pipelining + v7x dual-TensorCore sharding), sublane-aligned for the (B_t*S, D) block."""
    bytes_per_batch = seq * (2 * d_text + d_ctx) * itemsize        # text + out + ctx rows
    bt = max(1, block_budget_bytes // (2 * bytes_per_batch))       # 2x: double-buffered blocks
    desired_steps = min(batch, 4) if batch > 1 else 1
    bt = min(bt, max(1, batch // desired_steps))
    # (B_t * S) must be a multiple of 8 (sublane alignment of the flattened block).
    align = 8 // math.gcd(seq, 8)
    bt = max(align, (bt // align) * align)
    return bt


def multimodal_attention(text, ctx, params):
    """text: (B, S, D) f32, ctx: (B, S, C) f32 -> (B, S, D)."""
    B, S, D = text.shape
    _, _, C = ctx.shape
    w1t, b1, w2t, b2, v_row, vb = params   # (D,D),(1,D),(C,D),(1,D),(1,D),(1,1)
    del vb                                  # constant shift inside the softmax cancels exactly
    bias = b1 + b2                          # fold the two projection biases

    # Per-generation VMEM budget (v5e/v6e: 128 MiB, v7x: 64 MiB per TensorCore).
    try:
        vmem_cap = pltpu.get_tpu_info().vmem_capacity_bytes
    except Exception:
        vmem_cap = 64 * 1024 * 1024
    vmem_limit = min(int(vmem_cap * 3 // 4), 100 * 1024 * 1024)
    block_budget = vmem_limit // 2          # headroom for weights + compiler scratch

    itemsize = jnp.dtype(text.dtype).itemsize
    bt = _pick_batch_tile(B, S, D, C, itemsize, block_budget)

    # Pad the batch so it divides the tile (padded rows are zeros -> finite softmax ->
    # sliced off below); then flatten batch*seq in the wrapper (free metadata reshape).
    B_pad = ((B + bt - 1) // bt) * bt
    if B_pad != B:
        pad = B_pad - B
        text_in = jnp.pad(text, ((0, pad), (0, 0), (0, 0)))
        ctx_in = jnp.pad(ctx, ((0, pad), (0, 0), (0, 0)))
    else:
        text_in, ctx_in = text, ctx
    text2 = text_in.reshape(B_pad * S, D)
    ctx2 = ctx_in.reshape(B_pad * S, C)

    R = bt * S
    grid = (B_pad // bt,)

    kernel = functools.partial(mma_kernel, seq=S)

    out2 = pl.pallas_call(
        kernel,
        out_shape=jax.ShapeDtypeStruct((B_pad * S, D), text.dtype),
        grid_spec=pltpu.PrefetchScalarGridSpec(
            num_scalar_prefetch=0,
            grid=grid,
            in_specs=[
                pl.BlockSpec((R, D), lambda b: (b, 0)),   # text rows tile
                pl.BlockSpec((R, C), lambda b: (b, 0)),   # context rows tile
                # Small constant operands: whole-array resident in VMEM (one copy,
                # one DMA, no per-step double buffer).
                pl.BlockSpec(memory_space=pltpu.MemorySpace.VMEM),   # W1^T (D, D)
                pl.BlockSpec(memory_space=pltpu.MemorySpace.VMEM),   # W2^T (C, D)
                pl.BlockSpec(memory_space=pltpu.MemorySpace.VMEM),   # b1+b2 (1, D)
                pl.BlockSpec(memory_space=pltpu.MemorySpace.VMEM),   # V row (1, D)
            ],
            out_specs=pl.BlockSpec((R, D), lambda b: (b, 0)),
        ),
        compiler_params=pltpu.CompilerParams(
            dimension_semantics=("parallel",),   # batch-tile axis -> megacore sharding
            vmem_limit_bytes=vmem_limit,
        ),
    )(text2, ctx2, w1t, w2t, bias, v_row)

    out = out2.reshape(B_pad, S, D)
    return out[:B] if B_pad != B else out


def init_params(key, text_dim, ctx_dim):
    """Deterministic init mimicking PyTorch Linear default (uniform +-1/sqrt(fan_in))."""
    k = jax.random.split(key, 6)

    def u(kk, shape, fan_in):
        bound = 1.0 / np.sqrt(fan_in)
        return jax.random.uniform(kk, shape, jnp.float32, -bound, bound)

    # PyTorch weight layout is (out, in); store transposed (in, out) for the kernel.
    w1t = u(k[0], (text_dim, text_dim), text_dim)        # W1^T
    b1 = u(k[1], (1, text_dim), text_dim)
    w2t = u(k[2], (ctx_dim, text_dim), ctx_dim)          # W2^T
    b2 = u(k[3], (1, text_dim), text_dim)
    v_row = u(k[4], (1, text_dim), text_dim)             # V as (1, D) row
    vb = u(k[5], (1, 1), text_dim)
    return (w1t, b1, w2t, b2, v_row, vb)


def reference(text, ctx, params):
    w1t, b1, w2t, b2, v_row, vb = params
    tp = text @ w1t + b1
    cp = ctx @ w2t + b2
    combined = jnp.tanh(tp + cp)
    scores = combined @ v_row.T + vb[0, 0]               # (B, S, 1)
    attn = jax.nn.softmax(scores, axis=1)
    return attn * text


if __name__ == "__main__":
    key = jax.random.PRNGKey(0)
    kp, kt, kc = jax.random.split(key, 3)

    B, S, D_text, D_ctx = 2, 8, 32, 16
    params = init_params(kp, D_text, D_ctx)
    text = jax.random.normal(kt, (B, S, D_text), jnp.float32)
    ctx = jax.random.normal(kc, (B, S, D_ctx), jnp.float32)

    out = jax.block_until_ready(multimodal_attention(text, ctx, params))

    ref = reference(text, ctx, params)
    np.testing.assert_allclose(np.asarray(out), np.asarray(ref), rtol=1e-5, atol=1e-5)

    print("KERNEL_OK")
</pallas_src>

<mosaic_0001>
module attributes {stable_mosaic.version = 11 : i64} {
  func.func @mma_kernel(%arg0: i32, %arg1: memref<8x32xf32, #tpu.memory_space<vmem>>, %arg2: memref<8x16xf32, #tpu.memory_space<vmem>>, %arg3: memref<32x32xf32, #tpu.memory_space<vmem>>, %arg4: memref<16x32xf32, #tpu.memory_space<vmem>>, %arg5: memref<1x32xf32, #tpu.memory_space<vmem>>, %arg6: memref<1x32xf32, #tpu.memory_space<vmem>>, %arg7: memref<8x32xf32, #tpu.memory_space<vmem>>) attributes {dimension_semantics = [#tpu.dimension_semantics<parallel>], iteration_bounds = array<i64: 2>, scalar_prefetch = 0 : i64, scratch_operands = 0 : i64, tpu.core_type = #tpu.core_type<tc>, window_params = [{transform_indices = @transform_0, window_bounds = array<i64: 8, 32>}, {transform_indices = @transform_1, window_bounds = array<i64: 8, 16>}, {pipeline_mode = #tpu.pipeline_mode<synchronous>, transform_indices = @transform_2, window_bounds = array<i64: 32, 32>}, {pipeline_mode = #tpu.pipeline_mode<synchronous>, transform_indices = @transform_3, window_bounds = array<i64: 16, 32>}, {pipeline_mode = #tpu.pipeline_mode<synchronous>, transform_indices = @transform_4, window_bounds = array<i64: 1, 32>}, {pipeline_mode = #tpu.pipeline_mode<synchronous>, transform_indices = @transform_5, window_bounds = array<i64: 1, 32>}, {transform_indices = @transform_6, window_bounds = array<i64: 8, 32>}]} {
    %c0 = arith.constant 0 : index
    %c0_0 = arith.constant 0 : index
    %0 = vector.load %arg1[%c0, %c0_0] : memref<8x32xf32, #tpu.memory_space<vmem>>, vector<8x32xf32>
    %c0_1 = arith.constant 0 : index
    %c0_2 = arith.constant 0 : index
    %1 = vector.load %arg2[%c0_1, %c0_2] : memref<8x16xf32, #tpu.memory_space<vmem>>, vector<8x16xf32>
    %c0_3 = arith.constant 0 : index
    %c0_4 = arith.constant 0 : index
    %2 = vector.load %arg3[%c0_3, %c0_4] : memref<32x32xf32, #tpu.memory_space<vmem>>, vector<32x32xf32>
    %cst = arith.constant dense<0.000000e+00> : vector<8x32xf32>
    %3 = tpu.matmul %0, %2, %cst {dimension_numbers = #tpu.dot_dimension_numbers<[1], [0], [0], [1], [0, 0, 1, 1], [], []>} : vector<8x32xf32>, vector<32x32xf32>, vector<8x32xf32> -> vector<8x32xf32>
    %c0_5 = arith.constant 0 : index
    %c0_6 = arith.constant 0 : index
    %4 = vector.load %arg4[%c0_5, %c0_6] : memref<16x32xf32, #tpu.memory_space<vmem>>, vector<16x32xf32>
    %cst_7 = arith.constant dense<0.000000e+00> : vector<8x32xf32>
    %5 = tpu.matmul %1, %4, %cst_7 {dimension_numbers = #tpu.dot_dimension_numbers<[1], [0], [0], [1], [0, 0, 1, 1], [], []>} : vector<8x16xf32>, vector<16x32xf32>, vector<8x32xf32> -> vector<8x32xf32>
    %6 = arith.addf %3, %5 : vector<8x32xf32>
    %c0_8 = arith.constant 0 : index
    %c0_9 = arith.constant 0 : index
    %7 = vector.load %arg5[%c0_8, %c0_9] : memref<1x32xf32, #tpu.memory_space<vmem>>, vector<1x32xf32>
    %8 = vector.broadcast %7 : vector<1x32xf32> to vector<8x32xf32>
    %9 = arith.addf %6, %8 : vector<8x32xf32>
    %10 = math.tanh %9 : vector<8x32xf32>
    %c0_10 = arith.constant 0 : index
    %c0_11 = arith.constant 0 : index
    %11 = vector.load %arg6[%c0_10, %c0_11] : memref<1x32xf32, #tpu.memory_space<vmem>>, vector<1x32xf32>
    %12 = vector.broadcast %11 : vector<1x32xf32> to vector<8x32xf32>
    %13 = arith.mulf %10, %12 : vector<8x32xf32>
    %cst_12 = arith.constant dense<0.000000e+00> : vector<8xf32>
    %14 = vector.multi_reduction <add>, %13, %cst_12 [1] : vector<8x32xf32> to vector<8xf32>
    %15 = vector.shape_cast %14 : vector<8xf32> to vector<8x1xf32>
    %16 = vector.shape_cast %15 : vector<8x1xf32> to vector<1x8x1xf32>
    %cst_13 = arith.constant dense<0xFF800000> : vector<1x1xf32>
    %17 = vector.multi_reduction <maximumf>, %16, %cst_13 [1] : vector<1x8x1xf32> to vector<1x1xf32>
    %18 = vector.shape_cast %17 : vector<1x1xf32> to vector<1x1x1xf32>
    %19 = vector.broadcast %18 : vector<1x1x1xf32> to vector<1x8x1xf32>
    %20 = arith.subf %16, %19 : vector<1x8x1xf32>
    %21 = math.exp %20 : vector<1x8x1xf32>
    %cst_14 = arith.constant dense<0.000000e+00> : vector<1x1xf32>
    %22 = vector.multi_reduction <add>, %21, %cst_14 [1] : vector<1x8x1xf32> to vector<1x1xf32>
    %23 = vector.shape_cast %22 : vector<1x1xf32> to vector<1x1x1xf32>
    %24 = tpu.reciprocal %23 : vector<1x1x1xf32> -> vector<1x1x1xf32>
    %25 = vector.broadcast %24 : vector<1x1x1xf32> to vector<1x8x1xf32>
    %26 = arith.mulf %21, %25 : vector<1x8x1xf32>
    %27 = vector.shape_cast %26 : vector<1x8x1xf32> to vector<8x1xf32>
    %28 = vector.broadcast %27 : vector<8x1xf32> to vector<8x32xf32>
    %29 = arith.mulf %28, %0 : vector<8x32xf32>
    %c0_15 = arith.constant 0 : index
    %c0_16 = arith.constant 0 : index
    %30 = vector.load %arg7[%c0_15, %c0_16] : memref<8x32xf32, #tpu.memory_space<vmem>>, vector<8x32xf32>
    tpu.vector_store %arg7[%c0_15, %c0_16], %29 {strides = array<i32>} : memref<8x32xf32, #tpu.memory_space<vmem>>, vector<8x32xf32>,
    return
  }
  func.func @transform_0(%arg0: i32) -> (i32, i32) {
    %c0_i32 = arith.constant 0 : i32
    %c0_i32_0 = arith.constant 0 : i32
    return %arg0, %c0_i32 : i32, i32
  }
  func.func @transform_1(%arg0: i32) -> (i32, i32) {
    %c0_i32 = arith.constant 0 : i32
    %c0_i32_0 = arith.constant 0 : i32
    return %arg0, %c0_i32 : i32, i32
  }
  func.func @transform_2(%arg0: i32) -> (i32, i32) {
    %c0_i32 = arith.constant 0 : i32
    %c0_i32_0 = arith.constant 0 : i32
    %c0_i32_1 = arith.constant 0 : i32
    return %c0_i32, %c0_i32_0 : i32, i32
  }
  func.func @transform_3(%arg0: i32) -> (i32, i32) {
    %c0_i32 = arith.constant 0 : i32
    %c0_i32_0 = arith.constant 0 : i32
    %c0_i32_1 = arith.constant 0 : i32
    return %c0_i32, %c0_i32_0 : i32, i32
  }
  func.func @transform_4(%arg0: i32) -> (i32, i32) {
    %c0_i32 = arith.constant 0 : i32
    %c0_i32_0 = arith.constant 0 : i32
    %c0_i32_1 = arith.constant 0 : i32
    return %c0_i32, %c0_i32_0 : i32, i32
  }
  func.func @transform_5(%arg0: i32) -> (i32, i32) {
    %c0_i32 = arith.constant 0 : i32
    %c0_i32_0 = arith.constant 0 : i32
    %c0_i32_1 = arith.constant 0 : i32
    return %c0_i32, %c0_i32_0 : i32, i32
  }
  func.func @transform_6(%arg0: i32) -> (i32, i32) {
    %c0_i32 = arith.constant 0 : i32
    %c0_i32_0 = arith.constant 0 : i32
    return %arg0, %c0_i32 : i32, i32
  }
}

</mosaic_0001>

<llo_original>
// kernel: tpu_custom_call.1
$region0: #{tpu_custom_call.1}
  #allocation0 [shape = 'u32[]', space=smem, size = 0x4, offset = 0x4, fixed_abs, tag = 'smem constant byte address 0x4 - core index']
  #allocation1 [shape = 'u32[72,128]{1,0:T(1,128)}', space=vmem, size = 0x9000, scoped, tag = 'internal scratch']
  %s0 = inlined_call_operand.hbm [shape: f32[16,32], index: 0, kind: input, shape index: {}]
  %s1 = inlined_call_operand.hbm [shape: f32[16,16], index: 1, kind: input, shape index: {}]
  %s2 = inlined_call_operand.hbm [shape: f32[32,32], index: 2, kind: input, shape index: {}]
  %s3 = inlined_call_operand.hbm [shape: f32[16,32], index: 3, kind: input, shape index: {}]
  %s4 = inlined_call_operand.vmem [shape: f32[1,32], index: 4, kind: input, shape index: {}]
  %s5 = inlined_call_operand.vmem [shape: f32[1,32], index: 5, kind: input, shape index: {}]
  %s6 = inlined_call_operand.hbm [shape: f32[16,32], index: 6, kind: output, shape index: {}]
  %s7 = sld [smem:[#allocation0]]
  $region73: #{tpu_custom_call.1} parent=0
    _
  %s9 = ssub.s32 1, %s7
  %s10 = scalar_select 0, %s9, %s7
  $region1: #{tpu_custom_call.1} parent=0
    #allocation2 [shape = 'u8[8192]{0}', space=vmem, size = 0x2000, scoped, tag = 'input window, operand 0']
    #allocation3 [shape = 's32[2]{0}', space=sflag, size = 0x8, scoped, tag = 'scoped memory for tpu_custom_call.1']
    #allocation4 [shape = 's32[2]{0}', space=sflag, size = 0x8, scoped, tag = 'scoped memory for tpu_custom_call.1']
    #allocation5 [shape = 'u8[8192]{0}', space=vmem, size = 0x2000, scoped, tag = 'input window, operand 1']
    #allocation6 [shape = 's32[2]{0}', space=sflag, size = 0x8, scoped, tag = 'scoped memory for tpu_custom_call.1']
    #allocation7 [shape = 'u8[16384]{0}', space=vmem, size = 0x4000, scoped, tag = 'input window, operand 2, single buffered']
    #allocation8 [shape = 'u8[8192]{0}', space=vmem, size = 0x2000, scoped, tag = 'input window, operand 3, single buffered']
    #allocation9 [shape = 's32[1]{0}', space=sflag, size = 0x4, scoped, tag = 'scoped memory for tpu_custom_call.1']
    #allocation10 [shape = 'u8[8192]{0}', space=vmem, size = 0x2000, scoped, tag = 'output window, operand 0']
    %11 = vsyncpa [#allocation3], 0
    %s12 = scalar_lea.sflag [#allocation3], 1
    %13 = vsyncpa %s12, 0
    %14 = vsyncpa [#allocation6], 0
    %s15 = scalar_lea.sflag [#allocation6], 1
    %16 = vsyncpa %s15, 0
    %17 = vsyncpa [#allocation9], 0
    %18 = vsyncpa [#allocation4], 0
    %s19 = scalar_lea.sflag [#allocation4], 1
    %20 = vsyncpa %s19, 0
    loop: start=0, step=1, limit=4
    $region2: #{tpu_custom_call.1} parent=1 // loop_pre_header
      _
    $region3: #{tpu_custom_call.1} parent=1 // loop_header
      %s22 = sphi 0, %s26
      %p23 = scmp.ge.s32.totalorder %s22, 4
      %s32 = sphi 0, %s34
      %s35 = sphi 0, %s32
      %s36 = sphi 0, %s35
      %s52 = sphi 0, %s36
      %s58 = sphi 0, %s60
      %s61 = sphi 0, %s58
      %s62 = sphi 0, %s61
      %s78 = sphi 0, %s62
      %s82 = sphi 0, %s82
      %s84 = sphi 0, %s82
      %s85 = sphi 0, %s84
      %s99 = sphi 0, %s85
      %s103 = sphi 0, %s103
      %s105 = sphi 0, %s103
      %s106 = sphi 0, %s105
      %s120 = sphi 0, %s106
      %s124 = sphi 0, %s124
      %s126 = sphi 0, %s124
      %s127 = sphi 0, %s126
      %s141 = sphi 0, %s127
      %s145 = sphi 0, %s145
      %s147 = sphi 0, %s145
      %s148 = sphi 0, %s147
      %s162 = sphi 0, %s148
      %s168 = sphi 0, %s170
      %s171 = sphi 0, %s168
      %s172 = sphi 0, %s171
      %s188 = sphi 0, %s172
    $region4: #{tpu_custom_call.1} parent=1 // loop_header_branch
      %25 = sbr.rel (%p23) target = $region8
    $region5: #{tpu_custom_call.1} parent=1 // loop_body
      %s27 = ssub.s32 %s22, 1
      %s28 = ssub.s32 %s22, 2
      %s29 = sadd.s32 %s22, 1
      %s30 = ssub.s32 %s22, %s29
      %p31 = scmp.eq.s32.totalorder %s30, 0
      %s33 = sadd.s32 %s32, 1
      %s34 = scalar_select %p31, %s32, %s33
      %p37 = pneg %p31
      %p38 = scmp.eq.s32.totalorder %s22, 1
      %p39 = por %p37, %p38
      %p40 = scmp.ne.s32.totalorder %s32, %s35
      %p41 = scmp.eq.s32.totalorder %s22, 0
      %p42 = por %p40, %p41
      %p43 = scmp.ne.s32.totalorder %s32, %s35
      %p44 = scmp.eq.s32.totalorder %s27, 1
      %p45 = por %p43, %p44
      %p46 = scmp.ne.s32.totalorder %s35, %s36
      %p47 = scmp.eq.s32.totalorder %s27, 0
      %p48 = por %p46, %p47
      %p49 = scmp.ne.s32.totalorder %s35, %s36
      %p50 = scmp.eq.s32.totalorder %s28, 1
      %p51 = por %p49, %p50
      %p53 = scmp.ne.s32.totalorder %s36, %s52
      %p54 = scmp.eq.s32.totalorder %s28, 0
      %p55 = por %p53, %p54
      %s56 = ssub.s32 %s22, %s29
      %p57 = scmp.eq.s32.totalorder %s56, 0
      %s59 = sadd.s32 %s58, 1
      %s60 = scalar_select %p57, %s58, %s59
      %p63 = pneg %p57
      %p64 = scmp.eq.s32.totalorder %s22, 1
      %p65 = por %p63, %p64
      %p66 = scmp.ne.s32.totalorder %s58, %s61
      %p67 = scmp.eq.s32.totalorder %s22, 0
      %p68 = por %p66, %p67
      %p69 = scmp.ne.s32.totalorder %s58, %s61
      %p70 = scmp.eq.s32.totalorder %s27, 1
      %p71 = por %p69, %p70
      %p72 = scmp.ne.s32.totalorder %s61, %s62
      %p73 = scmp.eq.s32.totalorder %s27, 0
      %p74 = por %p72, %p73
      %p75 = scmp.ne.s32.totalorder %s61, %s62
      %p76 = scmp.eq.s32.totalorder %s28, 1
      %p77 = por %p75, %p76
      %p79 = scmp.ne.s32.totalorder %s62, %s78
      %p80 = scmp.eq.s32.totalorder %s28, 0
      %p81 = por %p79, %p80
      %s83 = sadd.s32 %s82, 1
      %p86 = scmp.eq.s32.totalorder %s22, 1
      %p87 = scmp.ne.s32.totalorder %s82, %s84
      %p88 = scmp.eq.s32.totalorder %s22, 0
      %p89 = por %p87, %p88
      %p90 = scmp.ne.s32.totalorder %s82, %s84
      %p91 = scmp.eq.s32.totalorder %s27, 1
      %p92 = por %p90, %p91
      %p93 = scmp.ne.s32.totalorder %s84, %s85
      %p94 = scmp.eq.s32.totalorder %s27, 0
      %p95 = por %p93, %p94
      %p96 = scmp.ne.s32.totalorder %s84, %s85
      %p97 = scmp.eq.s32.totalorder %s28, 1
      %p98 = por %p96, %p97
      %p100 = scmp.ne.s32.totalorder %s85, %s99
      %p101 = scmp.eq.s32.totalorder %s28, 0
      %p102 = por %p100, %p101
      %s104 = sadd.s32 %s103, 1
      %p107 = scmp.eq.s32.totalorder %s22, 1
      %p108 = scmp.ne.s32.totalorder %s103, %s105
      %p109 = scmp.eq.s32.totalorder %s22, 0
      %p110 = por %p108, %p109
      %p111 = scmp.ne.s32.totalorder %s103, %s105
      %p112 = scmp.eq.s32.totalorder %s27, 1
      %p113 = por %p111, %p112
      %p114 = scmp.ne.s32.totalorder %s105, %s106
      %p115 = scmp.eq.s32.totalorder %s27, 0
      %p116 = por %p114, %p115
      %p117 = scmp.ne.s32.totalorder %s105, %s106
      %p118 = scmp.eq.s32.totalorder %s28, 1
      %p119 = por %p117, %p118
      %p121 = scmp.ne.s32.totalorder %s106, %s120
      %p122 = scmp.eq.s32.totalorder %s28, 0
      %p123 = por %p121, %p122
      %s125 = sadd.s32 %s124, 1
      %p128 = scmp.eq.s32.totalorder %s22, 1
      %p129 = scmp.ne.s32.totalorder %s124, %s126
      %p130 = scmp.eq.s32.totalorder %s22, 0
      %p131 = por %p129, %p130
      %p132 = scmp.ne.s32.totalorder %s124, %s126
      %p133 = scmp.eq.s32.totalorder %s27, 1
      %p134 = por %p132, %p133
      %p135 = scmp.ne.s32.totalorder %s126, %s127
      %p136 = scmp.eq.s32.totalorder %s27, 0
      %p137 = por %p135, %p136
      %p138 = scmp.ne.s32.totalorder %s126, %s127
      %p139 = scmp.eq.s32.totalorder %s28, 1
      %p140 = por %p138, %p139
      %p142 = scmp.ne.s32.totalorder %s127, %s141
      %p143 = scmp.eq.s32.totalorder %s28, 0
      %p144 = por %p142, %p143
      %s146 = sadd.s32 %s145, 1
      %p149 = scmp.eq.s32.totalorder %s22, 1
      %p150 = scmp.ne.s32.totalorder %s145, %s147
      %p151 = scmp.eq.s32.totalorder %s22, 0
      %p152 = por %p150, %p151
      %p153 = scmp.ne.s32.totalorder %s145, %s147
      %p154 = scmp.eq.s32.totalorder %s27, 1
      %p155 = por %p153, %p154
      %p156 = scmp.ne.s32.totalorder %s147, %s148
      %p157 = scmp.eq.s32.totalorder %s27, 0
      %p158 = por %p156, %p157
      %p159 = scmp.ne.s32.totalorder %s147, %s148
      %p160 = scmp.eq.s32.totalorder %s28, 1
      %p161 = por %p159, %p160
      %p163 = scmp.ne.s32.totalorder %s148, %s162
      %p164 = scmp.eq.s32.totalorder %s28, 0
      %p165 = por %p163, %p164
      %s166 = ssub.s32 %s22, %s29
      %p167 = scmp.eq.s32.totalorder %s166, 0
      %s169 = sadd.s32 %s168, 1
      %s170 = scalar_select %p167, %s168, %s169
      %p173 = pneg %p167
      %p174 = scmp.eq.s32.totalorder %s22, 1
      %p175 = por %p173, %p174
      %p176 = scmp.ne.s32.totalorder %s168, %s171
      %p177 = scmp.eq.s32.totalorder %s22, 0
      %p178 = por %p176, %p177
      %p179 = scmp.ne.s32.totalorder %s168, %s171
      %p180 = scmp.eq.s32.totalorder %s27, 1
      %p181 = por %p179, %p180
      %p182 = scmp.ne.s32.totalorder %s171, %s172
      %p183 = scmp.eq.s32.totalorder %s27, 0
      %p184 = por %p182, %p183
      %p185 = scmp.ne.s32.totalorder %s171, %s172
      %p186 = scmp.eq.s32.totalorder %s28, 1
      %p187 = por %p185, %p186
      %p189 = scmp.ne.s32.totalorder %s172, %s188
      %p190 = scmp.eq.s32.totalorder %s28, 0
      %p191 = por %p189, %p190
      %p192 = scmp.le.s32.totalorder 1, %s22
      %p193 = scmp.lt.s32.totalorder %s22, 3
      %p194 = pnand %p192, %p193
      %p195 = pneg %p194
      // Predicated region
      $region9: #{tpu_custom_call.1} parent=5 // pred_check
        _
      $region10: #{tpu_custom_call.1} parent=5 // pred_check_branch
        %197 = sbr.rel (%p194) target = $region12
      $region11: #{tpu_custom_call.1} parent=5 // pred_region
        %s198 = ssub.s32 %s22, 1
        // Predicated region
        $region13: #{tpu_custom_call.1} parent=11 // pred_check
          %p199 = pneg %p95
        $region14: #{tpu_custom_call.1} parent=11 // pred_check_branch
          %201 = sbr.rel (%p199) target = $region16
        $region15: #{tpu_custom_call.1} parent=11 // pred_region
          %203 = vsyncadd [#allocation6], 0
          %s204 = sshll.u32 %s2, 4
          %s205 = int_to_ptr.hbm [resolvable:$true] %s204
          %s206 = sshll.u32 [#allocation7], 4
          %s207 = int_to_ptr.vmem [resolvable:$true] %s206
          %212 = dma.hbm_to_vmem [thread:$0]  %s205, 512, %s207, [#allocation6], 128, 128, 8
        $region16: #{tpu_custom_call.1} parent=11 // pred_fallthru
          _
        // Predicated region
        $region17: #{tpu_custom_call.1} parent=11 // pred_check
          %p213 = pneg %p116
        $region18: #{tpu_custom_call.1} parent=11 // pred_check_branch
          %215 = sbr.rel (%p213) target = $region20
        $region19: #{tpu_custom_call.1} parent=11 // pred_region
          %217 = vsyncadd [#allocation9], 0
          %s218 = sshll.u32 %s3, 4
          %s219 = int_to_ptr.hbm [resolvable:$true] %s218
          %s220 = sshll.u32 [#allocation8], 4
          %s221 = int_to_ptr.vmem [resolvable:$true] %s220
          %226 = dma.hbm_to_vmem [thread:$0]  %s219, 256, %s221, [#allocation9], 128, 128, 8
        $region20: #{tpu_custom_call.1} parent=11 // pred_fallthru
          _
        // Predicated region
        $region21: #{tpu_custom_call.1} parent=11 // pred_check
          %p227 = pneg %p137
        $region22: #{tpu_custom_call.1} parent=11 // pred_check_branch
          %229 = sbr.rel (%p227) target = $region24
        $region23: #{tpu_custom_call.1} parent=11 // pred_region
          _
        $region24: #{tpu_custom_call.1} parent=11 // pred_fallthru
          _
        // Predicated region
        $region25: #{tpu_custom_call.1} parent=11 // pred_check
          %p230 = pneg %p158
        $region26: #{tpu_custom_call.1} parent=11 // pred_check_branch
          %232 = sbr.rel (%p230) target = $region28
        $region27: #{tpu_custom_call.1} parent=11 // pred_region
          _
        $region28: #{tpu_custom_call.1} parent=11 // pred_fallthru
          _
      $region12: #{tpu_custom_call.1} parent=5 // pred_fallthru
        _
      %p233 = scmp.lt.s32.totalorder %s22, 2
      // Predicated region
      $region29: #{tpu_custom_call.1} parent=5 // pred_check
        %p234 = pneg %p233
      $region30: #{tpu_custom_call.1} parent=5 // pred_check_branch
        %236 = sbr.rel (%p234) target = $region32
      $region31: #{tpu_custom_call.1} parent=5 // pred_region
        // Predicated region
        $region33: #{tpu_custom_call.1} parent=31 // pred_check
          %p237 = pneg %p42
        $region34: #{tpu_custom_call.1} parent=31 // pred_check_branch
          %239 = sbr.rel (%p237) target = $region36
        $region35: #{tpu_custom_call.1} parent=31 // pred_region
          %s240 = sand.u32 %s32, 1
          %s241 = scalar_lea.sflag [#allocation3], %s240
          %s242 = sand.u32 %s32, 1
          %s243 = smul.addr %s242, 8
          %s244 = scalar_lea.vmem [#allocation2], %s243
          %246 = vsyncadd %s241, 0
          %s247 = smul.addr %s22, 8
          %s248 = scalar_lea.hbm %s0, %s247
          %s250 = sshll.u32 %s248, 4
          %s251 = int_to_ptr.hbm [resolvable:$true] %s250
          %s252 = sshll.u32 %s244, 4
          %s253 = int_to_ptr.vmem [resolvable:$true] %s252
          %255 = dma.hbm_to_vmem [thread:$0]  %s251, 128, %s253, %s241
        $region36: #{tpu_custom_call.1} parent=31 // pred_fallthru
          _
        // Predicated region
        $region37: #{tpu_custom_call.1} parent=31 // pred_check
          %p256 = pneg %p68
        $region38: #{tpu_custom_call.1} parent=31 // pred_check_branch
          %258 = sbr.rel (%p256) target = $region40
        $region39: #{tpu_custom_call.1} parent=31 // pred_region
          %s259 = sand.u32 %s22, 1
          %s260 = scalar_lea.sflag [#allocation6], %s259
          %s261 = sand.u32 %s58, 1
          %s262 = smul.addr %s261, 8
          %s263 = scalar_lea.vmem [#allocation5], %s262
          %265 = vsyncadd %s260, 0
          %s266 = smul.addr %s22, 8
          %s267 = scalar_lea.hbm %s1, %s266
          %s269 = sshll.u32 %s267, 4
          %s270 = int_to_ptr.hbm [resolvable:$true] %s269
          %s271 = sshll.u32 %s263, 4
          %s272 = int_to_ptr.vmem [resolvable:$true] %s271
          %274 = dma.hbm_to_vmem [thread:$0]  %s270, 128, %s272, %s260
        $region40: #{tpu_custom_call.1} parent=31 // pred_fallthru
          _
      $region32: #{tpu_custom_call.1} parent=5 // pred_fallthru
        _
      %p275 = scmp.le.s32.totalorder 1, %s22
      %p276 = scmp.lt.s32.totalorder %s22, 3
      %p277 = pnand %p275, %p276
      %p278 = pneg %p277
      // Predicated region
      $region41: #{tpu_custom_call.1} parent=5 // pred_check
        _
      $region42: #{tpu_custom_call.1} parent=5 // pred_check_branch
        %280 = sbr.rel (%p277) target = $region44
      $region43: #{tpu_custom_call.1} parent=5 // pred_region
        %s281 = ssub.s32 %s22, 1
        %s282 = sand.u32 %s35, 1
        %s283 = scalar_lea.sflag [#allocation3], %s282
        %s284 = sand.u32 %s35, 1
        %s285 = smul.addr %s284, 8
        %s286 = scalar_lea.vmem [#allocation2], %s285
        // Predicated region
        $region45: #{tpu_custom_call.1} parent=43 // pred_check
          %p287 = pneg %p48
        $region46: #{tpu_custom_call.1} parent=43 // pred_check_branch
          %289 = sbr.rel (%p287) target = $region48
        $region47: #{tpu_custom_call.1} parent=43 // pred_region
          %291 = dma.done %s283, 128
        $region48: #{tpu_custom_call.1} parent=43 // pred_fallthru
          _
        %s292 = sand.u32 %s27, 1
        %s293 = scalar_lea.sflag [#allocation6], %s292
        %s294 = sand.u32 %s61, 1
        %s295 = smul.addr %s294, 8
        %s296 = scalar_lea.vmem [#allocation5], %s295
        // Predicated region
        $region49: #{tpu_custom_call.1} parent=43 // pred_check
          %p297 = pneg %p74
        $region50: #{tpu_custom_call.1} parent=43 // pred_check_branch
          %299 = sbr.rel (%p297) target = $region52
        $region51: #{tpu_custom_call.1} parent=43 // pred_region
          %301 = dma.done %s293, 128
        $region52: #{tpu_custom_call.1} parent=43 // pred_fallthru
          _
        // Predicated region
        $region53: #{tpu_custom_call.1} parent=43 // pred_check
          %p302 = pneg %p95
        $region54: #{tpu_custom_call.1} parent=43 // pred_check_branch
          %304 = sbr.rel (%p302) target = $region56
        $region55: #{tpu_custom_call.1} parent=43 // pred_region
          %306 = dma.done [#allocation6], 512
        $region56: #{tpu_custom_call.1} parent=43 // pred_fallthru
          _
        // Predicated region
        $region57: #{tpu_custom_call.1} parent=43 // pred_check
          %p307 = pneg %p116
        $region58: #{tpu_custom_call.1} parent=43 // pred_check_branch
          %309 = sbr.rel (%p307) target = $region60
        $region59: #{tpu_custom_call.1} parent=43 // pred_region
          %311 = dma.done [#allocation9], 256
        $region60: #{tpu_custom_call.1} parent=43 // pred_fallthru
          _
        %s312 = sand.u32 %s35, 1
        %s313 = scalar_lea.sflag [#allocation3], %s312
        %s314 = sand.u32 %s35, 1
        %s315 = smul.addr %s314, 8
        %s316 = scalar_lea.vmem [#allocation2], %s315
        %p317 = pneg %p48
        %p318 = pneg %p45
        %s319 = sand.u32 %s27, 1
        %s320 = scalar_lea.sflag [#allocation6], %s319
        %s321 = sand.u32 %s61, 1
        %s322 = smul.addr %s321, 8
        %s323 = scalar_lea.vmem [#allocation5], %s322
        %p324 = pneg %p74
        %p325 = pneg %p71
        %p326 = pneg %p95
        %p327 = pneg %p92
        %p328 = pneg %p116
        %p329 = pneg %p113
        %p330 = pneg %p137
        %p331 = pneg %p134
        %p332 = pneg %p158
        %p333 = pneg %p155
        %p334 = pneg %p184
        %p335 = pneg %p181
        %s336 = sand.u32 %s171, 1
        %s337 = scalar_lea.sflag [#allocation4], %s336
        %s338 = sand.u32 %s171, 1
        %s339 = smul.addr %s338, 8
        %s340 = scalar_lea.vmem [#allocation10], %s339
        %v341 = vld [vmem:[%s286] sm:$0xff]
        %v342 = vld [vmem:[%s296] sm:$0xff]
        %v343 = vld [vmem:[#allocation7] sm:$0xff]
        %v344 = vld [vmem:[#allocation7 + $0x8] sm:$0xff]
        %v345 = vld [vmem:[#allocation7 + $0x10] sm:$0xff]
        %v346 = vld [vmem:[#allocation7 + $0x18] sm:$0xff]
        %v347 = vld [vmem:[#allocation8] sm:$0xff]
        %v348 = vld [vmem:[#allocation8 + $0x8] sm:$0xff]
        %vm349 = vcmask 130048
        %v351 = vsel %vm349, %v342, 0
        %353 = vmatpush.msra.mxu0 0.0
        %354 = vmatpush.msra.mxu0 0.0
        %355 = vmatpush.msra.mxu0 0.0
        %356 = vmatpush.msra.mxu0 0.0
        %357 = vmatpush.msra.mxu0 0.0
        %358 = vmatpush.msra.mxu0 0.0
        %359 = vmatpush.msra.mxu0 0.0
        %360 = vmatpush.msra.mxu0 0.0
        %361 = vmatpush.msra.mxu0 0.0
        %362 = vmatpush.msra.mxu0 0.0
        %363 = vmatpush.msra.mxu0 0.0
        %364 = vmatpush.msra.mxu0 0.0
        %365 = vmatpush.msra.mxu0 0.0
        %366 = vmatpush.msra.mxu0 0.0
        %367 = vmatpush.msra.mxu0 %v348
        %368 = vmatpush.msra.mxu0 %v347
        %369 = vmatmul.f32.gmra.mxu0 %v351
        %v370 = vpop.f32.mrf.mxu0
        %v371 = vadd.f32 0.0, %v370
        %372 = vdwg.mxu0
        %vm373 = vcmask 261120
        %v375 = vsel %vm373, %v341, 0
        %377 = vmatpush.msra.mxu0 0.0
        %378 = vmatpush.msra.mxu0 0.0
        %379 = vmatpush.msra.mxu0 0.0
        %380 = vmatpush.msra.mxu0 0.0
        %381 = vmatpush.msra.mxu0 0.0
        %382 = vmatpush.msra.mxu0 0.0
        %383 = vmatpush.msra.mxu0 0.0
        %384 = vmatpush.msra.mxu0 0.0
        %385 = vmatpush.msra.mxu0 0.0
        %386 = vmatpush.msra.mxu0 0.0
        %387 = vmatpush.msra.mxu0 0.0
        %388 = vmatpush.msra.mxu0 0.0
        %389 = vmatpush.msra.mxu0 %v346
        %390 = vmatpush.msra.mxu0 %v345
        %391 = vmatpush.msra.mxu0 %v344
        %392 = vmatpush.msra.mxu0 %v343
        %393 = vmatmul.f32.gmra.mxu0 %v375
        %v394 = vpop.f32.mrf.mxu0
        %v395 = vadd.f32 %v371, %v394
        %396 = vdwg.mxu0
        %v397 = vld [vmem:[%s4] sm:$0x1]
        %v399 = vperm.slane %v397, 0
        %v401 = vadd.f32 %v395, %v399
        %v402 = vtanh.pop %v401
        %v403 = vld [vmem:[%s5] sm:$0x1]
        %v405 = vperm.slane %v403, 0
        %v407 = vmul.f32 %v402, %v405
        %v408 = vsel %vm373, %v407, 0.0
        %409 = vadd.xlane.f32.xlu0 %v408
        %v410 = vpop.xlane.xlu0 %409
        %v411 = vrot.slane %v410, 4
        %v412 = vmax.f32 %v410, %v411
        %v413 = vrot.slane %v412, 2
        %v414 = vmax.f32 %v412, %v413
        %v415 = vrot.slane %v414, 1
        %v416 = vmax.f32 %v414, %v415
        %v417 = vsub.f32 %v410, %v416
        %v418 = vmul.f32 %v417, 1.442695
        %v419 = vpow.pop %v418
        %v420 = vrot.slane %v419, 4
        %v421 = vadd.f32 %v419, %v420
        %v422 = vrot.slane %v421, 2
        %v423 = vadd.f32 %v421, %v422
        %v424 = vrot.slane %v423, 1
        %v425 = vadd.f32 %v423, %v424
        %v426 = vrcp.pop %v425
        %v427 = vmul.f32 %v425, %v426
        %v428 = vsub.f32 1.0, %v427
        %v429 = vmul.f32 %v426, %v428
        %v430 = vadd.f32 %v426, %v429
        %vm431 = vweird.f32 %v425
        %vm432 = vweird.f32 %v426
        %vm433 = vmor %vm431, %vm432
        %v434 = vsel %vm433, %v426, %v430
        %v435 = vand.u32 2147483647, %v425
        %vm436 = vcmp.eq.f32.partialorder %v435, 8.507059e+37
        %v437 = vand.u32 %v425, 2147483648
        %v438 = vor.u32 1.1754944e-38, %v437
        %v439 = vsel %vm436, %v438, %v434
        %v440 = vmul.f32 %v419, %v439
        %v441 = vmul.f32 %v440, %v341
        %442 = vst.msk [vmem:[%s340] sm:$0xff] %vm373, %v441
        %s443 = sand.u32 %s171, 1
        %s444 = scalar_lea.sflag [#allocation4], %s443
        %s445 = sand.u32 %s171, 1
        %s446 = smul.addr %s445, 8
        %s447 = scalar_lea.vmem [#allocation10], %s446
        // Predicated region
        $region61: #{tpu_custom_call.1} parent=43 // pred_check
          %p448 = pneg %p181
        $region62: #{tpu_custom_call.1} parent=43 // pred_check_branch
          %450 = sbr.rel (%p448) target = $region64
        $region63: #{tpu_custom_call.1} parent=43 // pred_region
          %452 = vsyncadd %s444, 0
          %s453 = smul.addr %s27, 8
          %s454 = scalar_lea.hbm %s6, %s453
          %s456 = sshll.u32 %s447, 4
          %s457 = int_to_ptr.vmem [resolvable:$true] %s456
          %s458 = sshll.u32 %s454, 4
          %s459 = int_to_ptr.hbm [resolvable:$true] %s458
          %461 = dma.vmem_to_hbm [thread:$0]  %s457, 128, %s459, %s444
        $region64: #{tpu_custom_call.1} parent=43 // pred_fallthru
          _
      $region44: #{tpu_custom_call.1} parent=5 // pred_fallthru
        _
      %p462 = scmp.le.s32.totalorder 2, %s22
      // Predicated region
      $region65: #{tpu_custom_call.1} parent=5 // pred_check
        %p463 = pneg %p462
      $region66: #{tpu_custom_call.1} parent=5 // pred_check_branch
        %465 = sbr.rel (%p463) target = $region68
      $region67: #{tpu_custom_call.1} parent=5 // pred_region
        %s466 = ssub.s32 %s22, 2
        // Predicated region
        $region69: #{tpu_custom_call.1} parent=67 // pred_check
          %p467 = pneg %p187
        $region70: #{tpu_custom_call.1} parent=67 // pred_check_branch
          %469 = sbr.rel (%p467) target = $region72
        $region71: #{tpu_custom_call.1} parent=67 // pred_region
          %s470 = sand.u32 %s172, 1
          %s471 = scalar_lea.sflag [#allocation4], %s470
          %s472 = sand.u32 %s172, 1
          %s473 = smul.addr %s472, 8
          %s474 = scalar_lea.vmem [#allocation10], %s473
          %476 = dma.done %s471, 128
        $region72: #{tpu_custom_call.1} parent=67 // pred_fallthru
          _
      $region68: #{tpu_custom_call.1} parent=5 // pred_fallthru
        _
    $region6: #{tpu_custom_call.1} parent=1 // loop_footer
      %s26 = sadd.s32 1, %s22
    $region7: #{tpu_custom_call.1} parent=1 // loop_footer_branch
      %21 = sbr.rel target = $region3
    $region8: #{tpu_custom_call.1} parent=1 // loop_exit
      _
    %477 = vsyncpa [#allocation3], 1
    %s478 = scalar_lea.sflag [#allocation3], 1
    %479 = vsyncpa %s478, 1
    %480 = vsyncpa [#allocation6], 1
    %s481 = scalar_lea.sflag [#allocation6], 1
    %482 = vsyncpa %s481, 1
    %483 = vsyncpa [#allocation9], 1
    %484 = vsyncpa [#allocation4], 1
    %s485 = scalar_lea.sflag [#allocation4], 1
    %486 = vsyncpa %s485, 1

</llo_original>
